<compile_context>
chip_gen: v6e
topology: v6e:2x2x1
jax: 0.10.0
libtpu: 0.0.40
codegen_flags: <defaults>
</compile_context>

<pallas_src>
import jax
import jax.numpy as jnp
from jax.experimental import pallas as pl
from jax.experimental.pallas import tpu as pltpu


def _round_up(x, m):
    return (x + m - 1) // m * m


def _fused_forward_kernel(wb_ref, x_ref, noise_ref, out_ref, pad_ref):
    """Single invocation over the whole (tiny) problem.

    wb_ref:    SMEM (2,)   float32   [conv_weight, conv_bias]
    x_ref:     VMEM (N, H, W)        input images
    noise_ref: VMEM (2, N, Hp, 128)  [0] = `other`, [1] = `padding1`
    out_ref:   VMEM (2, N, Hp, 128)  [0] = v2, [1] = padding1 (lane-padded)
    pad_ref:   VMEM (Hr, 128)        scratch canvas for zero_pad(x_i, 1)
    """
    w = wb_ref[0]
    b = wb_ref[1]
    n, h, wd = x_ref.shape
    hp = out_ref.shape[2]

    # Zero the canvas once: every image overwrites exactly the same interior
    # region (rows 1..h, lanes 0..wd-1), so the zero border stays valid.
    pad_ref[...] = jnp.zeros_like(pad_ref)

    for i in range(n):  # n is static & tiny -> unrolled
        # Place x_i at row offset 1: the leading zero row comes for free.
        pad_ref[1:1 + h, 0:wd] = x_ref[i]
        # Rotate lanes by +1: the zero tail (lanes >= wd) wraps around to
        # lane 0 and becomes the leading zero column.
        xpad = pltpu.roll(pad_ref[...], shift=1, axis=1)[0:hp, :]
        # conv(1x1, padding=1) + bias + other, plus the concatenated noise half.
        out_ref[0, i] = xpad * w + b + noise_ref[0, i]
        out_ref[1, i] = noise_ref[1, i]


def _draw_noise(key, n, hp, wl):
    # Host-side stand-in for the two torch.randn tensors, lane-padded to `wl`
    # so the kernel's output stores stay lane-dense (extra lanes are sliced off).
    return jax.random.normal(key, (2, n, hp, wl), dtype=jnp.float32)


@jax.jit
def model_forward(x1, conv_weight, conv_bias, key):
    """Replicates Model.forward(x1) with defaults (other=False, padding1=True)."""
    n, c, h, w = x1.shape
    assert c == 1, "torch4322 Model uses Conv2d(1, 1, kernel_size=1)"
    hp, wp = h + 2, w + 2
    wl = _round_up(wp, 128)  # lane-dense output width (128 here)

    x3 = x1.reshape(n, h, w).astype(jnp.float32)  # free metadata reshape
    wb = jnp.stack([jnp.asarray(conv_weight, jnp.float32).reshape(()),
                    jnp.asarray(conv_bias, jnp.float32).reshape(())])
    noise = _draw_noise(key, n, hp, wl)

    out = pl.pallas_call(
        _fused_forward_kernel,
        out_shape=jax.ShapeDtypeStruct((2, n, hp, wl), jnp.float32),
        in_specs=[
            pl.BlockSpec(memory_space=pltpu.MemorySpace.SMEM),   # [w, b]
            pl.BlockSpec(memory_space=pltpu.MemorySpace.VMEM),   # x
            pl.BlockSpec(memory_space=pltpu.MemorySpace.VMEM),   # noise
        ],
        out_specs=pl.BlockSpec(memory_space=pltpu.MemorySpace.VMEM),
        scratch_shapes=[pltpu.VMEM((_round_up(hp, 8), wl), jnp.float32)],
        cost_estimate=pl.CostEstimate(
            flops=3 * n * hp * wl,
            transcendentals=0,
            bytes_accessed=4 * (n * h * w + 4 * n * hp * wl),
        ),
    )(wb, x3, noise)

    # (2, N, Hp, 128) -> (2N, 1, Hp, Wp): drop lane padding, contiguous split.
    return out[..., :wp].reshape(2 * n, c, hp, wp)


if __name__ == "__main__":
    root = jax.random.PRNGKey(0)
    k_x, k_w, k_b, k_noise = jax.random.split(root, 4)

    # Matches the module's driver: x1 = torch.randn(2, 1, 64, 64)
    x1 = jax.random.normal(k_x, (2, 1, 64, 64), dtype=jnp.float32)
    # Conv2d(1, 1, 1) parameters: weight (1,1,1,1) and bias (1,) -> scalars.
    conv_weight = jax.random.normal(k_w, (), dtype=jnp.float32) * 0.5
    conv_bias = jax.random.normal(k_b, (), dtype=jnp.float32) * 0.1

    n, c, h, w = x1.shape
    hp, wp = h + 2, w + 2
    wl = _round_up(wp, 128)

    out = jax.block_until_ready(model_forward(x1, conv_weight, conv_bias, k_noise))
    assert out.shape == (2 * n, c, hp, wp), out.shape

    # Reference: same noise stream regenerated from the same key.
    noise = _draw_noise(k_noise, n, hp, wl)
    other = noise[0, :, :, :wp].reshape(n, c, hp, wp)
    padding1 = noise[1, :, :, :wp].reshape(n, c, hp, wp)
    v1 = jnp.pad(x1, ((0, 0), (0, 0), (1, 1), (1, 1))) * conv_weight + conv_bias
    v3_ref = jnp.concatenate([v1 + other, padding1], axis=0)

    assert jnp.allclose(out, v3_ref, atol=1e-5, rtol=1e-5), (
        float(jnp.max(jnp.abs(out - v3_ref))))

    print("KERNEL_OK")
</pallas_src>

<mosaic_0001>
module attributes {stable_mosaic.version = 11 : i64} {
  func.func @_fused_forward_kernel(%arg0: memref<2xf32, #tpu.memory_space<smem>>, %arg1: memref<2x64x64xf32, #tpu.memory_space<vmem>>, %arg2: memref<2x2x66x128xf32, #tpu.memory_space<vmem>>, %arg3: memref<2x2x66x128xf32, #tpu.memory_space<vmem>>, %arg4: memref<72x128xf32, #tpu.memory_space<vmem>>) attributes {dimension_semantics = [], scalar_prefetch = 0 : i64, scratch_operands = 1 : i64, tpu.core_type = #tpu.core_type<tc>} {
    %c0 = arith.constant 0 : index
    %0 = memref.load %arg0[%c0] : memref<2xf32, #tpu.memory_space<smem>>
    %c1 = arith.constant 1 : index
    %1 = memref.load %arg0[%c1] : memref<2xf32, #tpu.memory_space<smem>>
    %cst = arith.constant 0.000000e+00 : f32
    %2 = vector.broadcast %cst : f32 to vector<72x128xf32>
    %c0_0 = arith.constant 0 : index
    %c0_1 = arith.constant 0 : index
    %3 = vector.load %arg4[%c0_0, %c0_1] : memref<72x128xf32, #tpu.memory_space<vmem>>, vector<72x128xf32>
    tpu.vector_store %arg4[%c0_0, %c0_1], %2 {strides = array<i32>} : memref<72x128xf32, #tpu.memory_space<vmem>>, vector<72x128xf32>,
    %c0_2 = arith.constant 0 : index
    %c0_3 = arith.constant 0 : index
    %c0_4 = arith.constant 0 : index
    %4 = vector.load %arg1[%c0_2, %c0_3, %c0_4] : memref<2x64x64xf32, #tpu.memory_space<vmem>>, vector<1x64x64xf32>
    %5 = vector.shape_cast %4 : vector<1x64x64xf32> to vector<64x64xf32>
    %c1_5 = arith.constant 1 : index
    %c0_6 = arith.constant 0 : index
    %6 = vector.load %arg4[%c1_5, %c0_6] : memref<72x128xf32, #tpu.memory_space<vmem>>, vector<64x64xf32>
    tpu.vector_store %arg4[%c1_5, %c0_6], %5 {strides = array<i32>} : memref<72x128xf32, #tpu.memory_space<vmem>>, vector<64x64xf32>,
    %c0_7 = arith.constant 0 : index
    %c0_8 = arith.constant 0 : index
    %7 = vector.load %arg4[%c0_7, %c0_8] : memref<72x128xf32, #tpu.memory_space<vmem>>, vector<72x128xf32>
    %c1_i32 = arith.constant 1 : i32
    %8 = tpu.dynamic_rotate %7 by %c1_i32 dim 1 : vector<72x128xf32>, i32 -> vector<72x128xf32>
    %9 = vector.extract_strided_slice %8 {offsets = [0, 0], sizes = [66, 128], strides = [1, 1]} : vector<72x128xf32> to vector<66x128xf32>
    %10 = vector.broadcast %0 : f32 to vector<66x128xf32>
    %11 = arith.mulf %9, %10 : vector<66x128xf32>
    %12 = vector.broadcast %1 : f32 to vector<66x128xf32>
    %13 = arith.addf %11, %12 : vector<66x128xf32>
    %c0_9 = arith.constant 0 : index
    %c0_10 = arith.constant 0 : index
    %c0_11 = arith.constant 0 : index
    %c0_12 = arith.constant 0 : index
    %14 = vector.load %arg2[%c0_9, %c0_10, %c0_11, %c0_12] : memref<2x2x66x128xf32, #tpu.memory_space<vmem>>, vector<1x1x66x128xf32>
    %15 = vector.shape_cast %14 : vector<1x1x66x128xf32> to vector<66x128xf32>
    %16 = arith.addf %13, %15 : vector<66x128xf32>
    %c0_13 = arith.constant 0 : index
    %c0_14 = arith.constant 0 : index
    %c0_15 = arith.constant 0 : index
    %c0_16 = arith.constant 0 : index
    %17 = vector.load %arg3[%c0_13, %c0_14, %c0_15, %c0_16] : memref<2x2x66x128xf32, #tpu.memory_space<vmem>>, vector<1x1x66x128xf32>
    %18 = vector.shape_cast %17 : vector<1x1x66x128xf32> to vector<66x128xf32>
    %19 = vector.shape_cast %16 : vector<66x128xf32> to vector<1x1x66x128xf32>
    tpu.vector_store %arg3[%c0_13, %c0_14, %c0_15, %c0_16], %19 {strides = array<i32>} : memref<2x2x66x128xf32, #tpu.memory_space<vmem>>, vector<1x1x66x128xf32>,
    %c1_17 = arith.constant 1 : index
    %c0_18 = arith.constant 0 : index
    %c0_19 = arith.constant 0 : index
    %c0_20 = arith.constant 0 : index
    %20 = vector.load %arg2[%c1_17, %c0_18, %c0_19, %c0_20] : memref<2x2x66x128xf32, #tpu.memory_space<vmem>>, vector<1x1x66x128xf32>
    %21 = vector.shape_cast %20 : vector<1x1x66x128xf32> to vector<66x128xf32>
    %c1_21 = arith.constant 1 : index
    %c0_22 = arith.constant 0 : index
    %c0_23 = arith.constant 0 : index
    %c0_24 = arith.constant 0 : index
    %22 = vector.load %arg3[%c1_21, %c0_22, %c0_23, %c0_24] : memref<2x2x66x128xf32, #tpu.memory_space<vmem>>, vector<1x1x66x128xf32>
    %23 = vector.shape_cast %22 : vector<1x1x66x128xf32> to vector<66x128xf32>
    %24 = vector.shape_cast %21 : vector<66x128xf32> to vector<1x1x66x128xf32>
    tpu.vector_store %arg3[%c1_21, %c0_22, %c0_23, %c0_24], %24 {strides = array<i32>} : memref<2x2x66x128xf32, #tpu.memory_space<vmem>>, vector<1x1x66x128xf32>,
    %c1_25 = arith.constant 1 : index
    %c0_26 = arith.constant 0 : index
    %c0_27 = arith.constant 0 : index
    %25 = vector.load %arg1[%c1_25, %c0_26, %c0_27] : memref<2x64x64xf32, #tpu.memory_space<vmem>>, vector<1x64x64xf32>
    %26 = vector.shape_cast %25 : vector<1x64x64xf32> to vector<64x64xf32>
    %c1_28 = arith.constant 1 : index
    %c0_29 = arith.constant 0 : index
    %27 = vector.load %arg4[%c1_28, %c0_29] : memref<72x128xf32, #tpu.memory_space<vmem>>, vector<64x64xf32>
    tpu.vector_store %arg4[%c1_28, %c0_29], %26 {strides = array<i32>} : memref<72x128xf32, #tpu.memory_space<vmem>>, vector<64x64xf32>,
    %c0_30 = arith.constant 0 : index
    %c0_31 = arith.constant 0 : index
    %28 = vector.load %arg4[%c0_30, %c0_31] : memref<72x128xf32, #tpu.memory_space<vmem>>, vector<72x128xf32>
    %c1_i32_32 = arith.constant 1 : i32
    %29 = tpu.dynamic_rotate %28 by %c1_i32_32 dim 1 : vector<72x128xf32>, i32 -> vector<72x128xf32>
    %30 = vector.extract_strided_slice %29 {offsets = [0, 0], sizes = [66, 128], strides = [1, 1]} : vector<72x128xf32> to vector<66x128xf32>
    %31 = vector.broadcast %0 : f32 to vector<66x128xf32>
    %32 = arith.mulf %30, %31 : vector<66x128xf32>
    %33 = vector.broadcast %1 : f32 to vector<66x128xf32>
    %34 = arith.addf %32, %33 : vector<66x128xf32>
    %c0_33 = arith.constant 0 : index
    %c1_34 = arith.constant 1 : index
    %c0_35 = arith.constant 0 : index
    %c0_36 = arith.constant 0 : index
    %35 = vector.load %arg2[%c0_33, %c1_34, %c0_35, %c0_36] : memref<2x2x66x128xf32, #tpu.memory_space<vmem>>, vector<1x1x66x128xf32>
    %36 = vector.shape_cast %35 : vector<1x1x66x128xf32> to vector<66x128xf32>
    %37 = arith.addf %34, %36 : vector<66x128xf32>
    %c0_37 = arith.constant 0 : index
    %c1_38 = arith.constant 1 : index
    %c0_39 = arith.constant 0 : index
    %c0_40 = arith.constant 0 : index
    %38 = vector.load %arg3[%c0_37, %c1_38, %c0_39, %c0_40] : memref<2x2x66x128xf32, #tpu.memory_space<vmem>>, vector<1x1x66x128xf32>
    %39 = vector.shape_cast %38 : vector<1x1x66x128xf32> to vector<66x128xf32>
    %40 = vector.shape_cast %37 : vector<66x128xf32> to vector<1x1x66x128xf32>
    tpu.vector_store %arg3[%c0_37, %c1_38, %c0_39, %c0_40], %40 {strides = array<i32>} : memref<2x2x66x128xf32, #tpu.memory_space<vmem>>, vector<1x1x66x128xf32>,
    %c1_41 = arith.constant 1 : index
    %c1_42 = arith.constant 1 : index
    %c0_43 = arith.constant 0 : index
    %c0_44 = arith.constant 0 : index
    %41 = vector.load %arg2[%c1_41, %c1_42, %c0_43, %c0_44] : memref<2x2x66x128xf32, #tpu.memory_space<vmem>>, vector<1x1x66x128xf32>
    %42 = vector.shape_cast %41 : vector<1x1x66x128xf32> to vector<66x128xf32>
    %c1_45 = arith.constant 1 : index
    %c1_46 = arith.constant 1 : index
    %c0_47 = arith.constant 0 : index
    %c0_48 = arith.constant 0 : index
    %43 = vector.load %arg3[%c1_45, %c1_46, %c0_47, %c0_48] : memref<2x2x66x128xf32, #tpu.memory_space<vmem>>, vector<1x1x66x128xf32>
    %44 = vector.shape_cast %43 : vector<1x1x66x128xf32> to vector<66x128xf32>
    %45 = vector.shape_cast %42 : vector<66x128xf32> to vector<1x1x66x128xf32>
    tpu.vector_store %arg3[%c1_45, %c1_46, %c0_47, %c0_48], %45 {strides = array<i32>} : memref<2x2x66x128xf32, #tpu.memory_space<vmem>>, vector<1x1x66x128xf32>,
    return
  }
}

</mosaic_0001>

<llo_original>
// kernel: model_forward.1
$region0: #{model_forward.1}
  #allocation0 [shape = 'u32[]', space=smem, size = 0x4, offset = 0x4, fixed_abs, tag = 'smem constant byte address 0x4 - core index']
  #allocation1 [shape = 'u32[144,128]{1,0:T(1,128)}', space=vmem, size = 0x12000, scoped, tag = 'internal scratch']
  #allocation2 [shape = 'f32[72,128]{1,0:T(8,128)}', space=vmem, size = 0x9000, scoped, tag = 'scratch operand']
  %s0 = inlined_call_operand.vmem [shape: f32[2], index: 0, kind: input, shape index: {}]
  %s1 = inlined_call_operand.vmem [shape: f32[2,64,64], index: 1, kind: input, shape index: {}]
  %s2 = inlined_call_operand.vmem [shape: f32[2,2,66,128], index: 2, kind: input, shape index: {}]
  %s3 = inlined_call_operand.vmem [shape: f32[2,2,66,128], index: 3, kind: output, shape index: {}]
  %s4 = sld [smem:[#allocation0]]
  $region26: #{model_forward.1} parent=0
    _
  %s6 = ssub.s32 1, %s4
  %s7 = scalar_select 0, %s6, %s4
  $region1: #{model_forward.1} parent=0
    #allocation3 [shape = 'u8[512]{0}', space=smem, size = 0x200, scoped, tag = 'input window, operand 0, single buffered']
    #allocation4 [shape = 's32[1]{0}', space=sflag, size = 0x4, scoped, tag = 'scoped memory for model_forward.1']
    %8 = vsyncpa [#allocation4], 0
    // Predicated region
    $region2: #{model_forward.1} parent=1 // pred_check
      _
    $region3: #{model_forward.1} parent=1 // pred_check_branch
      %10 = sbr.rel (0) target = $region5
    $region4: #{model_forward.1} parent=1 // pred_region
      %s12 = ssub.s32 16, 16
      %13 = vsyncadd [#allocation4], %s12
      %s15 = sshll.u32 %s0, 4
      %s16 = int_to_ptr.vmem [resolvable:$true] %s15
      %18 = dma.vmem_to_smem %s16, 16, [#allocation3], [#allocation4]
    $region5: #{model_forward.1} parent=1 // pred_fallthru
      _
    // Predicated region
    $region6: #{model_forward.1} parent=1 // pred_check
      _
    $region7: #{model_forward.1} parent=1 // pred_check_branch
      %20 = sbr.rel (0) target = $region9
    $region8: #{model_forward.1} parent=1 // pred_region
      _
    $region9: #{model_forward.1} parent=1 // pred_fallthru
      _
    // Predicated region
    $region10: #{model_forward.1} parent=1 // pred_check
      _
    $region11: #{model_forward.1} parent=1 // pred_check_branch
      %22 = sbr.rel (0) target = $region13
    $region12: #{model_forward.1} parent=1 // pred_region
      _
    $region13: #{model_forward.1} parent=1 // pred_fallthru
      _
    // Predicated region
    $region14: #{model_forward.1} parent=1 // pred_check
      _
    $region15: #{model_forward.1} parent=1 // pred_check_branch
      %24 = sbr.rel (0) target = $region17
    $region16: #{model_forward.1} parent=1 // pred_region
      %25 = dma.done [#allocation4], 16
    $region17: #{model_forward.1} parent=1 // pred_fallthru
      _
    %26 = sfence
    %s27 = sld [smem:[#allocation3]]
    %s28 = sld [smem:[#allocation3 + $0x1]]
    %29 = vst [vmem:[#allocation2] sm:$0xff] 0.0
    %30 = vst [vmem:[#allocation2 + $0x8] sm:$0xff] 0.0
    %31 = vst [vmem:[#allocation2 + $0x10] sm:$0xff] 0.0
    %32 = vst [vmem:[#allocation2 + $0x18] sm:$0xff] 0.0
    %33 = vst [vmem:[#allocation2 + $0x20] sm:$0xff] 0.0
    %34 = vst [vmem:[#allocation2 + $0x28] sm:$0xff] 0.0
    %35 = vst [vmem:[#allocation2 + $0x30] sm:$0xff] 0.0
    %36 = vst [vmem:[#allocation2 + $0x38] sm:$0xff] 0.0
    %37 = vst [vmem:[#allocation2 + $0x40] sm:$0xff] 0.0
    %v38 = vld [vmem:[%s1] sm:$0xff]
    %v39 = vld [vmem:[%s1 + $0x8] sm:$0xff]
    %v40 = vld [vmem:[%s1 + $0x10] sm:$0xff]
    %v41 = vld [vmem:[%s1 + $0x18] sm:$0xff]
    %v42 = vld [vmem:[%s1 + $0x20] sm:$0xff]
    %v43 = vld [vmem:[%s1 + $0x28] sm:$0xff]
    %v44 = vld [vmem:[%s1 + $0x30] sm:$0xff]
    %v45 = vld [vmem:[%s1 + $0x38] sm:$0xff]
    %vm46 = vcmask 523264
    %47 = vst.msk [vmem:[#allocation2 + $0x1] sm:$0xff] %vm46, %v38
    %48 = vst.msk [vmem:[#allocation2 + $0x9] sm:$0xff] %vm46, %v39
    %49 = vst.msk [vmem:[#allocation2 + $0x11] sm:$0xff] %vm46, %v40
    %50 = vst.msk [vmem:[#allocation2 + $0x19] sm:$0xff] %vm46, %v41
    %51 = vst.msk [vmem:[#allocation2 + $0x21] sm:$0xff] %vm46, %v42
    %52 = vst.msk [vmem:[#allocation2 + $0x29] sm:$0xff] %vm46, %v43
    %53 = vst.msk [vmem:[#allocation2 + $0x31] sm:$0xff] %vm46, %v44
    %54 = vst.msk [vmem:[#allocation2 + $0x39] sm:$0xff] %vm46, %v45
    %v55 = vld [vmem:[#allocation2] sm:$0xff]
    %v56 = vld [vmem:[#allocation2 + $0x8] sm:$0xff]
    %v57 = vld [vmem:[#allocation2 + $0x10] sm:$0xff]
    %v58 = vld [vmem:[#allocation2 + $0x18] sm:$0xff]
    %v59 = vld [vmem:[#allocation2 + $0x20] sm:$0xff]
    %v60 = vld [vmem:[#allocation2 + $0x28] sm:$0xff]
    %v61 = vld [vmem:[#allocation2 + $0x30] sm:$0xff]
    %v62 = vld [vmem:[#allocation2 + $0x38] sm:$0xff]
    %v63 = vld [vmem:[#allocation2 + $0x40] sm:$0xff]
    %64 = vrot.lane.b32.xlu0 %v55, 1
    %v65 = vpop.permute.xlu0 %64
    %66 = vrot.lane.b32.xlu0 %v56, 1
    %v67 = vpop.permute.xlu0 %66
    %68 = vrot.lane.b32.xlu0 %v57, 1
    %v69 = vpop.permute.xlu0 %68
    %70 = vrot.lane.b32.xlu0 %v58, 1
    %v71 = vpop.permute.xlu0 %70
    %72 = vrot.lane.b32.xlu0 %v59, 1
    %v73 = vpop.permute.xlu0 %72
    %74 = vrot.lane.b32.xlu0 %v60, 1
    %v75 = vpop.permute.xlu0 %74
    %76 = vrot.lane.b32.xlu0 %v61, 1
    %v77 = vpop.permute.xlu0 %76
    %78 = vrot.lane.b32.xlu0 %v62, 1
    %v79 = vpop.permute.xlu0 %78
    %80 = vrot.lane.b32.xlu0 %v63, 1
    %v81 = vpop.permute.xlu0 %80
    %v82 = vstv %s27
    %v83 = vmul.f32 %v65, %v82
    %v84 = vmul.f32 %v67, %v82
    %v85 = vmul.f32 %v69, %v82
    %v86 = vmul.f32 %v71, %v82
    %v87 = vmul.f32 %v73, %v82
    %v88 = vmul.f32 %v75, %v82
    %v89 = vmul.f32 %v77, %v82
    %v90 = vmul.f32 %v79, %v82
    %v91 = vmul.f32 %v81, %v82
    %v92 = vstv %s28
    %v93 = vadd.f32 %v83, %v92
    %v94 = vadd.f32 %v84, %v92
    %v95 = vadd.f32 %v85, %v92
    %v96 = vadd.f32 %v86, %v92
    %v97 = vadd.f32 %v87, %v92
    %v98 = vadd.f32 %v88, %v92
    %v99 = vadd.f32 %v89, %v92
    %v100 = vadd.f32 %v90, %v92
    %v101 = vadd.f32 %v91, %v92
    %v102 = vld [vmem:[%s2] sm:$0xff]
    %v103 = vld [vmem:[%s2 + $0x8] sm:$0xff]
    %v104 = vld [vmem:[%s2 + $0x10] sm:$0xff]
    %v105 = vld [vmem:[%s2 + $0x18] sm:$0xff]
    %v106 = vld [vmem:[%s2 + $0x20] sm:$0xff]
    %v107 = vld [vmem:[%s2 + $0x28] sm:$0xff]
    %v108 = vld [vmem:[%s2 + $0x30] sm:$0xff]
    %v109 = vld [vmem:[%s2 + $0x38] sm:$0xff]
    %v110 = vld [vmem:[%s2 + $0x40] sm:$0x3]
    %v111 = vadd.f32 %v93, %v102
    %v112 = vadd.f32 %v94, %v103
    %v113 = vadd.f32 %v95, %v104
    %v114 = vadd.f32 %v96, %v105
    %v115 = vadd.f32 %v97, %v106
    %v116 = vadd.f32 %v98, %v107
    %v117 = vadd.f32 %v99, %v108
    %v118 = vadd.f32 %v100, %v109
    %v119 = vadd.f32 %v101, %v110
    %120 = vst [vmem:[%s3] sm:$0xff] %v111
    %121 = vst [vmem:[%s3 + $0x8] sm:$0xff] %v112
    %122 = vst [vmem:[%s3 + $0x10] sm:$0xff] %v113
    %123 = vst [vmem:[%s3 + $0x18] sm:$0xff] %v114
    %124 = vst [vmem:[%s3 + $0x20] sm:$0xff] %v115
    %125 = vst [vmem:[%s3 + $0x28] sm:$0xff] %v116
    %126 = vst [vmem:[%s3 + $0x30] sm:$0xff] %v117
    %127 = vst [vmem:[%s3 + $0x38] sm:$0xff] %v118
    %128 = vst [vmem:[%s3 + $0x40] sm:$0x3] %v119
    %s129 = scalar_lea.vmem %s2, 144
    %v130 = vld [vmem:[%s129] sm:$0xff]
    %v131 = vld [vmem:[%s129 + $0x8] sm:$0xff]
    %v132 = vld [vmem:[%s129 + $0x10] sm:$0xff]
    %v133 = vld [vmem:[%s129 + $0x18] sm:$0xff]
    %v134 = vld [vmem:[%s129 + $0x20] sm:$0xff]
    %v135 = vld [vmem:[%s129 + $0x28] sm:$0xff]
    %v136 = vld [vmem:[%s129 + $0x30] sm:$0xff]
    %v137 = vld [vmem:[%s129 + $0x38] sm:$0xff]
    %v138 = vld [vmem:[%s129 + $0x40] sm:$0x3]
    %s139 = scalar_lea.vmem %s3, 144
    %140 = vst [vmem:[%s139] sm:$0xff] %v130
    %141 = vst [vmem:[%s139 + $0x8] sm:$0xff] %v131
    %142 = vst [vmem:[%s139 + $0x10] sm:$0xff] %v132
    %143 = vst [vmem:[%s139 + $0x18] sm:$0xff] %v133
    %144 = vst [vmem:[%s139 + $0x20] sm:$0xff] %v134
    %145 = vst [vmem:[%s139 + $0x28] sm:$0xff] %v135
    %146 = vst [vmem:[%s139 + $0x30] sm:$0xff] %v136
    %147 = vst [vmem:[%s139 + $0x38] sm:$0xff] %v137
    %148 = vst [vmem:[%s139 + $0x40] sm:$0x3] %v138
    %s149 = scalar_lea.vmem %s1, 64
    %v150 = vld [vmem:[%s149] sm:$0xff]
    %v151 = vld [vmem:[%s149 + $0x8] sm:$0xff]
    %v152 = vld [vmem:[%s149 + $0x10] sm:$0xff]
    %v153 = vld [vmem:[%s149 + $0x18] sm:$0xff]
    %v154 = vld [vmem:[%s149 + $0x20] sm:$0xff]
    %v155 = vld [vmem:[%s149 + $0x28] sm:$0xff]
    %v156 = vld [vmem:[%s149 + $0x30] sm:$0xff]
    %v157 = vld [vmem:[%s149 + $0x38] sm:$0xff]
    %158 = vst.msk [vmem:[#allocation2 + $0x1] sm:$0xff] %vm46, %v150
    %159 = vst.msk [vmem:[#allocation2 + $0x9] sm:$0xff] %vm46, %v151
    %160 = vst.msk [vmem:[#allocation2 + $0x11] sm:$0xff] %vm46, %v152
    %161 = vst.msk [vmem:[#allocation2 + $0x19] sm:$0xff] %vm46, %v153
    %162 = vst.msk [vmem:[#allocation2 + $0x21] sm:$0xff] %vm46, %v154
    %163 = vst.msk [vmem:[#allocation2 + $0x29] sm:$0xff] %vm46, %v155
    %164 = vst.msk [vmem:[#allocation2 + $0x31] sm:$0xff] %vm46, %v156
    %165 = vst.msk [vmem:[#allocation2 + $0x39] sm:$0xff] %vm46, %v157
    %v166 = vld [vmem:[#allocation2] sm:$0xff]
    %v167 = vld [vmem:[#allocation2 + $0x8] sm:$0xff]
    %v168 = vld [vmem:[#allocation2 + $0x10] sm:$0xff]
    %v169 = vld [vmem:[#allocation2 + $0x18] sm:$0xff]
    %v170 = vld [vmem:[#allocation2 + $0x20] sm:$0xff]
    %v171 = vld [vmem:[#allocation2 + $0x28] sm:$0xff]
    %v172 = vld [vmem:[#allocation2 + $0x30] sm:$0xff]
    %v173 = vld [vmem:[#allocation2 + $0x38] sm:$0xff]
    %v174 = vld [vmem:[#allocation2 + $0x40] sm:$0xff]
    %175 = vrot.lane.b32.xlu0 %v166, 1
    %v176 = vpop.permute.xlu0 %175
    %177 = vrot.lane.b32.xlu0 %v167, 1
    %v178 = vpop.permute.xlu0 %177
    %179 = vrot.lane.b32.xlu0 %v168, 1
    %v180 = vpop.permute.xlu0 %179
    %181 = vrot.lane.b32.xlu0 %v169, 1
    %v182 = vpop.permute.xlu0 %181
    %183 = vrot.lane.b32.xlu0 %v170, 1
    %v184 = vpop.permute.xlu0 %183
    %185 = vrot.lane.b32.xlu0 %v171, 1
    %v186 = vpop.permute.xlu0 %185
    %187 = vrot.lane.b32.xlu0 %v172, 1
    %v188 = vpop.permute.xlu0 %187
    %189 = vrot.lane.b32.xlu0 %v173, 1
    %v190 = vpop.permute.xlu0 %189
    %191 = vrot.lane.b32.xlu0 %v174, 1
    %v192 = vpop.permute.xlu0 %191
    %v193 = vmul.f32 %v176, %v82
    %v194 = vmul.f32 %v178, %v82
    %v195 = vmul.f32 %v180, %v82
    %v196 = vmul.f32 %v182, %v82
    %v197 = vmul.f32 %v184, %v82
    %v198 = vmul.f32 %v186, %v82
    %v199 = vmul.f32 %v188, %v82
    %v200 = vmul.f32 %v190, %v82
    %v201 = vmul.f32 %v192, %v82
    %v202 = vadd.f32 %v193, %v92
    %v203 = vadd.f32 %v194, %v92
    %v204 = vadd.f32 %v195, %v92
    %v205 = vadd.f32 %v196, %v92
    %v206 = vadd.f32 %v197, %v92
    %v207 = vadd.f32 %v198, %v92
    %v208 = vadd.f32 %v199, %v92
    %v209 = vadd.f32 %v200, %v92
    %v210 = vadd.f32 %v201, %v92
    %s211 = scalar_lea.vmem %s2, 72
    %v212 = vld [vmem:[%s211] sm:$0xff]
    %v213 = vld [vmem:[%s211 + $0x8] sm:$0xff]
    %v214 = vld [vmem:[%s211 + $0x10] sm:$0xff]
    %v215 = vld [vmem:[%s211 + $0x18] sm:$0xff]
    %v216 = vld [vmem:[%s211 + $0x20] sm:$0xff]
    %v217 = vld [vmem:[%s211 + $0x28] sm:$0xff]
    %v218 = vld [vmem:[%s211 + $0x30] sm:$0xff]
    %v219 = vld [vmem:[%s211 + $0x38] sm:$0xff]
    %v220 = vld [vmem:[%s211 + $0x40] sm:$0x3]
    %v221 = vadd.f32 %v202, %v212
    %v222 = vadd.f32 %v203, %v213
    %v223 = vadd.f32 %v204, %v214
    %v224 = vadd.f32 %v205, %v215
    %v225 = vadd.f32 %v206, %v216
    %v226 = vadd.f32 %v207, %v217
    %v227 = vadd.f32 %v208, %v218
    %v228 = vadd.f32 %v209, %v219
    %v229 = vadd.f32 %v210, %v220
    %s230 = scalar_lea.vmem %s3, 72
    %231 = vst [vmem:[%s230] sm:$0xff] %v221
    %232 = vst [vmem:[%s230 + $0x8] sm:$0xff] %v222
    %233 = vst [vmem:[%s230 + $0x10] sm:$0xff] %v223
    %234 = vst [vmem:[%s230 + $0x18] sm:$0xff] %v224
    %235 = vst [vmem:[%s230 + $0x20] sm:$0xff] %v225
    %236 = vst [vmem:[%s230 + $0x28] sm:$0xff] %v226
    %237 = vst [vmem:[%s230 + $0x30] sm:$0xff] %v227
    %238 = vst [vmem:[%s230 + $0x38] sm:$0xff] %v228
    %239 = vst [vmem:[%s230 + $0x40] sm:$0x3] %v229
    %s240 = scalar_lea.vmem %s2, 216
    %v241 = vld [vmem:[%s240] sm:$0xff]
    %v242 = vld [vmem:[%s240 + $0x8] sm:$0xff]
    %v243 = vld [vmem:[%s240 + $0x10] sm:$0xff]
    %v244 = vld [vmem:[%s240 + $0x18] sm:$0xff]
    %v245 = vld [vmem:[%s240 + $0x20] sm:$0xff]
    %v246 = vld [vmem:[%s240 + $0x28] sm:$0xff]
    %v247 = vld [vmem:[%s240 + $0x30] sm:$0xff]
    %v248 = vld [vmem:[%s240 + $0x38] sm:$0xff]
    %v249 = vld [vmem:[%s240 + $0x40] sm:$0x3]
    %s250 = scalar_lea.vmem %s3, 216
    %251 = vst [vmem:[%s250] sm:$0xff] %v241
    %252 = vst [vmem:[%s250 + $0x8] sm:$0xff] %v242
    %253 = vst [vmem:[%s250 + $0x10] sm:$0xff] %v243
    %254 = vst [vmem:[%s250 + $0x18] sm:$0xff] %v244
    %255 = vst [vmem:[%s250 + $0x20] sm:$0xff] %v245
    %256 = vst [vmem:[%s250 + $0x28] sm:$0xff] %v246
    %257 = vst [vmem:[%s250 + $0x30] sm:$0xff] %v247
    %258 = vst [vmem:[%s250 + $0x38] sm:$0xff] %v248
    %259 = vst [vmem:[%s250 + $0x40] sm:$0x3] %v249
    // Predicated region
    $region18: #{model_forward.1} parent=1 // pred_check
      _
    $region19: #{model_forward.1} parent=1 // pred_check_branch
      %261 = sbr.rel (0) target = $region21
    $region20: #{model_forward.1} parent=1 // pred_region
      _
    $region21: #{model_forward.1} parent=1 // pred_fallthru
      _
    // Predicated region
    $region22: #{model_forward.1} parent=1 // pred_check
      _
    $region23: #{model_forward.1} parent=1 // pred_check_branch
      %263 = sbr.rel (0) target = $region25
    $region24: #{model_forward.1} parent=1 // pred_region
      _
    $region25: #{model_forward.1} parent=1 // pred_fallthru
      _
    %264 = vsyncpa [#allocation4], 1

</llo_original>
